<compile_context>
chip_gen: v5e
topology: v5e:2x2
jax: 0.10.0
libtpu: 0.0.40
codegen_flags: <defaults>
</compile_context>

<pallas_src>
import jax
import jax.numpy as jnp
from jax.experimental import pallas as pl
from jax.experimental.pallas import tpu as pltpu


# ---------------------------------------------------------------------------
# Kernel body: both refs are lane-dense tiles in VMEM -> aligned vreg copy.
# ---------------------------------------------------------------------------
def _copy_kernel(x_ref, o_ref):
    o_ref[...] = x_ref[...]


_LANE = 128
_TARGET_LANES = 4096            # lane-tile target (multiple of 128)
_TARGET_TILE_BYTES = 8 << 20    # ~8 MiB per tile
_SMALL_COPY_BYTES = 2 << 20     # below this: single-block copy (no grid)
_VMEM_CAP_BYTES = 48 << 20      # safe scoped-VMEM ceiling across v5e/v6e/v7x


def _sublane_align(dtype) -> int:
    # 8 for 32-bit, 16 for 16-bit, 32 for 8-bit (sublane packing).
    itemsize = jnp.dtype(dtype).itemsize
    return max(8, 32 // max(itemsize, 1))


def _flat_view_dims(total: int, sub_align: int):
    """Pick (rows, cols) with rows*cols == total and cols % 128 == 0,
    preferring rows % sub_align == 0 and cols as large as possible."""
    if total % _LANE != 0:
        return None
    best = None
    for cols in range(_TARGET_LANES, 0, -_LANE):
        if total % cols == 0:
            rows = total // cols
            if rows % sub_align == 0 or rows == 1:
                return rows, cols
            if best is None:
                best = (rows, cols)
    return best


def _pick_tile(dim: int, target: int, align: int) -> int:
    if dim <= target:
        return dim                      # full-extent blocks are exempt from (8,128)
    return max((target // align) * align, align)


def _flatten_copy(x2: jax.Array, *, donate: bool = False) -> jax.Array:
    """Materializing Pallas copy of a 2-D lane-dense view of x."""
    rows, cols = x2.shape
    dtype = x2.dtype
    itemsize = jnp.dtype(dtype).itemsize
    nbytes = rows * cols * itemsize
    aliases = {0: 0} if donate else {}

    if nbytes <= _SMALL_COPY_BYTES:
        # Single block, no grid: one DMA in, one DMA out; no pipeline prologue.
        return pl.pallas_call(
            _copy_kernel,
            out_shape=jax.ShapeDtypeStruct((rows, cols), dtype),
            input_output_aliases=aliases,
        )(x2)

    sub = _sublane_align(dtype)
    ft = _pick_tile(cols, _TARGET_LANES, _LANE)
    bt_target = max(sub, _TARGET_TILE_BYTES // (ft * itemsize))
    bt = _pick_tile(rows, bt_target, sub)
    grid = (pl.cdiv(rows, bt), pl.cdiv(cols, ft))

    tile_bytes = bt * ft * itemsize
    # in + out, double-buffered, plus slack; floored/capped for v5e/v7x limits.
    vmem_limit = min(_VMEM_CAP_BYTES, max(16 << 20, 4 * tile_bytes + (4 << 20)))

    return pl.pallas_call(
        _copy_kernel,
        out_shape=jax.ShapeDtypeStruct((rows, cols), dtype),
        grid=grid,
        in_specs=[pl.BlockSpec((bt, ft), lambda i, j: (i, j))],
        out_specs=pl.BlockSpec((bt, ft), lambda i, j: (i, j)),
        input_output_aliases=aliases,
        compiler_params=pltpu.CompilerParams(
            dimension_semantics=("parallel", "parallel"),
            vmem_limit_bytes=vmem_limit,
        ),
    )(x2)


def flatten(x: jax.Array, *, materialize: bool = False,
            donate: bool = False) -> jax.Array:
    """Pallas equivalent of Flatten.forward: (B, ...) -> (B, prod(...)).

    materialize=False (default): metadata-only reshape -- the fastest correct
      implementation on every TPU generation (zero HBM traffic).
    materialize=True: explicit HBM materialization through a Pallas copy
      kernel.  Pass donate=True when the caller donates x so the compiler can
      alias input and output buffers (removes the HBM round-trip).

    Note: the wrapper reshapes are metadata-only for default row-major
    (contiguous) inputs; a non-default layout would copy outside the kernel.
    """
    B = x.shape[0]
    feat = 1
    for d in x.shape[1:]:
        feat *= d

    if not materialize:
        return x.reshape(B, feat)

    total = B * feat
    flat = _flat_view_dims(total, _sublane_align(x.dtype))
    if flat is not None:
        rows, cols = flat
        y = _flatten_copy(x.reshape(rows, cols), donate=donate)
    else:
        # Element count not 128-divisible: copy the (B, feat) view directly;
        # Pallas masks the edge blocks (correct, slightly less dense).
        y = _flatten_copy(x.reshape(B, feat), donate=donate)
    return y.reshape(B, feat)


if __name__ == "__main__":
    key = jax.random.PRNGKey(0)

    # 1) Small NCHW input consistent with the module's post-conv usage.
    B, C, H, W = 2, 4, 16, 16
    x = jax.random.normal(key, (B, C, H, W), dtype=jnp.float32)

    y_fast = flatten(x)                       # metadata-only default path
    y_kern = flatten(x, materialize=True)     # Pallas copy (single-block path)
    jax.block_until_ready((y_fast, y_kern))

    y_ref = x.reshape(B, -1)
    assert y_kern.shape == (B, C * H * W), y_kern.shape
    assert y_kern.dtype == x.dtype
    assert jnp.array_equal(y_fast, y_ref), "reshape path mismatch vs reference"
    assert jnp.array_equal(y_kern, y_ref), "Pallas flatten mismatch vs reference"

    # 2) Larger activation to exercise the tiled / pipelined copy path
    #    (16 MiB f32 -> flat (1024, 4096) view, 512x4096 tiles, grid (2, 1)).
    B2, C2, H2, W2 = 16, 64, 64, 64
    x_large = jax.random.normal(jax.random.PRNGKey(0),
                                (B2, C2, H2, W2), dtype=jnp.float32)
    y_large = flatten(x_large, materialize=True)
    jax.block_until_ready(y_large)
    assert y_large.shape == (B2, C2 * H2 * W2)
    assert jnp.array_equal(y_large, x_large.reshape(B2, -1)), \
        "tiled Pallas flatten mismatch vs reference"

    print("KERNEL_OK")
</pallas_src>

<mosaic_0001>
module attributes {stable_mosaic.version = 11 : i64} {
  func.func @_copy_kernel(%arg0: memref<1x2048xf32, #tpu.memory_space<vmem>>, %arg1: memref<1x2048xf32, #tpu.memory_space<vmem>>) attributes {dimension_semantics = [], scalar_prefetch = 0 : i64, scratch_operands = 0 : i64, tpu.core_type = #tpu.core_type<tc>} {
    %c0 = arith.constant 0 : index
    %c0_0 = arith.constant 0 : index
    %0 = vector.load %arg0[%c0, %c0_0] : memref<1x2048xf32, #tpu.memory_space<vmem>>, vector<1x2048xf32>
    %c0_1 = arith.constant 0 : index
    %c0_2 = arith.constant 0 : index
    %1 = vector.load %arg1[%c0_1, %c0_2] : memref<1x2048xf32, #tpu.memory_space<vmem>>, vector<1x2048xf32>
    tpu.vector_store %arg1[%c0_1, %c0_2], %0 {strides = array<i32>} : memref<1x2048xf32, #tpu.memory_space<vmem>>, vector<1x2048xf32>,
    return
  }
}

</mosaic_0001>

<llo_original>
// kernel: tpu_custom_call.1
$region0: #{tpu_custom_call.1}
  #allocation0 [shape = 'u32[]', space=smem, size = 0x4, offset = 0x4, fixed_abs, tag = 'smem constant byte address 0x4 - core index']
  #allocation1 [shape = 'u32[72,128]{1,0:T(1,128)}', space=vmem, size = 0x9000, scoped, tag = 'internal scratch']
  %s0 = inlined_call_operand.hbm [shape: f32[1,2048], index: 0, kind: input, shape index: {}]
  %s1 = inlined_call_operand.hbm [shape: f32[1,2048], index: 1, kind: output, shape index: {}]
  %s2 = sld [smem:[#allocation0]]
  $region18: #{tpu_custom_call.1} parent=0
    _
  %s4 = ssub.s32 1, %s2
  %s5 = scalar_select 0, %s4, %s2
  $region1: #{tpu_custom_call.1} parent=0
    #allocation2 [shape = 'u8[8192]{0}', space=vmem, size = 0x2000, scoped, tag = 'input window, operand 0, single buffered']
    #allocation3 [shape = 's32[1]{0}', space=sflag, size = 0x4, scoped, tag = 'scoped memory for tpu_custom_call.1']
    #allocation4 [shape = 's32[1]{0}', space=sflag, size = 0x4, scoped, tag = 'scoped memory for tpu_custom_call.1']
    #allocation5 [shape = 'u8[8192]{0}', space=vmem, size = 0x2000, scoped, tag = 'output window, operand 0, single buffered']
    %6 = vsyncpa [#allocation3], 0
    %7 = vsyncpa [#allocation4], 0
    // Predicated region
    $region2: #{tpu_custom_call.1} parent=1 // pred_check
      _
    $region3: #{tpu_custom_call.1} parent=1 // pred_check_branch
      %9 = sbr.rel (0) target = $region5
    $region4: #{tpu_custom_call.1} parent=1 // pred_region
      %11 = vsyncadd [#allocation3], 0
      %s13 = sshll.u32 %s0, 4
      %s14 = int_to_ptr.hbm [resolvable:$true] %s13
      %s15 = sshll.u32 [#allocation2], 4
      %s16 = int_to_ptr.vmem [resolvable:$true] %s15
      %18 = dma.hbm_to_vmem [thread:$0]  %s14, 256, %s16, [#allocation3]
    $region5: #{tpu_custom_call.1} parent=1 // pred_fallthru
      _
    // Predicated region
    $region6: #{tpu_custom_call.1} parent=1 // pred_check
      _
    $region7: #{tpu_custom_call.1} parent=1 // pred_check_branch
      %20 = sbr.rel (0) target = $region9
    $region8: #{tpu_custom_call.1} parent=1 // pred_region
      %22 = dma.done [#allocation3], 256
    $region9: #{tpu_custom_call.1} parent=1 // pred_fallthru
      _
    %v23 = vld [vmem:[#allocation2] sm:$0xff]
    %v24 = vld [vmem:[#allocation2 + $0x8] sm:$0xff]
    %25 = vst [vmem:[#allocation5] sm:$0xff] %v23
    %26 = vst [vmem:[#allocation5 + $0x8] sm:$0xff] %v24
    // Predicated region
    $region10: #{tpu_custom_call.1} parent=1 // pred_check
      _
    $region11: #{tpu_custom_call.1} parent=1 // pred_check_branch
      %28 = sbr.rel (0) target = $region13
    $region12: #{tpu_custom_call.1} parent=1 // pred_region
      %30 = vsyncadd [#allocation4], 0
      %s32 = sshll.u32 [#allocation5], 4
      %s33 = int_to_ptr.vmem [resolvable:$true] %s32
      %s34 = sshll.u32 %s1, 4
      %s35 = int_to_ptr.hbm [resolvable:$true] %s34
      %37 = dma.vmem_to_hbm [thread:$0]  %s33, 256, %s35, [#allocation4]
    $region13: #{tpu_custom_call.1} parent=1 // pred_fallthru
      _
    // Predicated region
    $region14: #{tpu_custom_call.1} parent=1 // pred_check
      _
    $region15: #{tpu_custom_call.1} parent=1 // pred_check_branch
      %39 = sbr.rel (0) target = $region17
    $region16: #{tpu_custom_call.1} parent=1 // pred_region
      %41 = dma.done [#allocation4], 256
    $region17: #{tpu_custom_call.1} parent=1 // pred_fallthru
      _
    %42 = vsyncpa [#allocation3], 1
    %43 = vsyncpa [#allocation4], 1

</llo_original>
